<compile_context>
chip_gen: v7x
topology: tpu7x:2x2x1
jax: 0.10.0
libtpu: 0.0.40
codegen_flags: <defaults>
</compile_context>

<pallas_src>
import functools

import numpy as np
import jax
import jax.numpy as jnp
from jax.experimental import pallas as pl
from jax.experimental.pallas import tpu as pltpu

TOPK = 5
LOSS_WEIGHT = 1.0
SCALE = 0.1            # weight_by_diff scale
MAX_BLOCK_M = 1024     # fg-sample lanes per grid step (multiple of 128)
NEG_PAD = -1e30        # softmax-neutral pad value for padded class columns


def _round_up(x, m):
    return ((x + m - 1) // m) * m


def pairank_loss_kernel(fg_score_t_ref, w_ref, rank_value_t_ref, rank_index_t_ref,
                        total_out_ref, count_out_ref, *, c_all):
    # ---- softmax over classes (sublane axis); samples stay lane-dense ----
    fg = fg_score_t_ref[...]                                   # (C_pad, BM)
    mx = jnp.max(fg, axis=0, keepdims=True)                    # (1, BM)
    ex = jnp.exp(fg - mx)
    denom = jnp.sum(ex, axis=0, keepdims=True)                 # (1, BM)
    # approx reciprocal runs on the EUP slot (~2^-12 rel err, within test rtol)
    scores_t = ex * pl.reciprocal(denom, approx=True)          # (C_pad, BM)

    # ---- single MXU matmul with precomputed W = fg_vec^T @ vec_seen ----
    # scores_all = scores @ (vec_seen^T @ fg_vec)  ==>  scores_all_t = W_t @ scores_t
    scores_all_t = jnp.dot(w_ref[...], scores_t,
                           preferred_element_type=jnp.float32)  # (CA_pad, BM)

    # ---- gather: y_pred[k, m] = scores_all[rank_index[k, m], m] ----
    # small static loop of lane-dense selects (c_all is small and static here).
    # TODO(synk): for class counts in the hundreds replace this O(C_all) select
    # loop with a bf16 one-hot MXU gather.
    idx_t = rank_index_t_ref[...]                              # (TOPK, BM) i32
    y_true_t = rank_value_t_ref[...]                           # (TOPK, BM) f32
    y_pred_t = jnp.zeros_like(y_true_t)
    for c in range(c_all):
        y_pred_t = jnp.where(idx_t == c, scores_all_t[c:c + 1, :], y_pred_t)

    # ---- all ordered top-k pairs, M lane-dense: (TOPK, TOPK, BM) ----
    td = y_true_t[:, None, :] - y_true_t[None, :, :]
    pd = y_pred_t[:, None, :] - y_pred_t[None, :, :]

    # mask*weight fused: (td>0)*|2*sigmoid(td/scale)-1| == relu(tanh(td/(2*scale)))
    weighted = jnp.maximum(jnp.tanh(td * (0.5 / SCALE)), 0.0)

    # BCEWithLogits with target == 1 on masked pairs: softplus(-pd), stable form.
    bce = jnp.maximum(-pd, 0.0) + jnp.log(1.0 + jnp.exp(-jnp.abs(pd)))

    pair_loss = weighted * bce                                 # (TOPK, TOPK, BM)
    # Reduce only over the pair axes; keep samples lane-dense in the output so
    # there is no per-step cross-lane reduction and no loop-carried scalar.
    total_out_ref[...] = jnp.sum(jnp.sum(pair_loss, axis=0), axis=0, keepdims=True)
    count_out_ref[...] = jnp.sum(
        jnp.sum((td > 0.0).astype(jnp.float32), axis=0), axis=0, keepdims=True)


@jax.jit
def pairank_loss(cls_score, labels, true_rank, vec_seen, vec_unseen):
    """Jittable wrapper mirroring PaiRankLoss.forward (reduction='mean', topk=5)."""
    rank_value, rank_index = true_rank
    cls_score = jnp.asarray(cls_score, jnp.float32)            # (N, C)
    labels = jnp.asarray(labels, jnp.int32)                    # (N,)
    vec_seen = jnp.asarray(vec_seen, jnp.float32)              # (D, C)
    vec_unseen = jnp.asarray(vec_unseen, jnp.float32)          # (D, Cu)
    rank_value = jnp.asarray(rank_value, jnp.float32)
    rank_index = jnp.asarray(rank_index, jnp.int32)

    N, C = cls_score.shape
    fg_vec = jnp.concatenate([vec_seen[:, 1:], vec_unseen[:, 1:]], axis=1)  # (D, C_all)
    C_ALL = fg_vec.shape[1]

    # ---- fixed-capacity foreground handling (no host sync / np.nonzero) ----
    # Background rows get all-zero y_true, so every pair they touch has td == 0
    # and contributes nothing to either the weighted sum or the pair count.
    valid = labels != 0                                        # (N,)
    fg_labels = jnp.maximum(labels - 1, 0)                     # bg clamped to 0, masked below
    rv = jnp.take(rank_value, fg_labels, axis=0)[:, :TOPK]     # (N, TOPK)
    ri = jnp.take(rank_index, fg_labels, axis=0)[:, :TOPK]     # (N, TOPK)
    rv = jnp.where(valid[:, None], rv, 0.0)

    # Precompute W so the kernel needs a single matmul (re-association of an f32
    # chain; verified against the reference within tolerance).
    w_t = fg_vec.T @ vec_seen                                  # (C_all, C)

    # ---- lane/sublane-friendly padding: sublane dims -> 8, lane dim -> block_m ----
    block_m = min(MAX_BLOCK_M, _round_up(N, 128))
    M_pad = _round_up(N, block_m)
    C_pad = _round_up(C, 8)
    CA_pad = _round_up(C_ALL, 8)

    # Padded class columns get a huge negative so softmax ignores them exactly;
    # padded sample lanes are all-zero -> y_true == 0 -> zero contribution.
    fg_score_p = jnp.pad(cls_score, ((0, 0), (0, C_pad - C)), constant_values=NEG_PAD)
    fg_score_p = jnp.pad(fg_score_p, ((0, M_pad - N), (0, 0)))
    fg_score_t = fg_score_p.T                                  # (C_pad, M_pad)

    w_t_p = jnp.pad(w_t, ((0, CA_pad - C_ALL), (0, C_pad - C)))  # (CA_pad, C_pad)

    rank_value_t = jnp.pad(rv.T, ((0, 0), (0, M_pad - N)))     # (TOPK, M_pad)
    rank_index_t = jnp.pad(ri.T, ((0, 0), (0, M_pad - N)))     # (TOPK, M_pad)

    grid = (M_pad // block_m,)
    kernel = functools.partial(pairank_loss_kernel, c_all=C_ALL)

    total_part, count_part = pl.pallas_call(
        kernel,
        out_shape=(jax.ShapeDtypeStruct((1, M_pad), jnp.float32),
                   jax.ShapeDtypeStruct((1, M_pad), jnp.float32)),
        grid_spec=pltpu.PrefetchScalarGridSpec(
            num_scalar_prefetch=0,
            grid=grid,
            in_specs=[
                pl.BlockSpec((C_pad, block_m), lambda i: (0, i)),   # fg_score_t (tiled over M)
                pl.BlockSpec((CA_pad, C_pad), lambda i: (0, 0)),    # W_t (resident)
                pl.BlockSpec((TOPK, block_m), lambda i: (0, i)),    # rank_value_t
                pl.BlockSpec((TOPK, block_m), lambda i: (0, i)),    # rank_index_t
            ],
            out_specs=(pl.BlockSpec((1, block_m), lambda i: (0, i)),  # per-block partial total
                       pl.BlockSpec((1, block_m), lambda i: (0, i))),  # per-block partial count
        ),
        compiler_params=pltpu.CompilerParams(
            # Each grid step writes a disjoint output slice -> truly parallel
            # (both TensorCores on v7x; no-op on v5e/v6e).
            dimension_semantics=("parallel",)),
    )(fg_score_t, w_t_p, rank_value_t, rank_index_t)

    total = jnp.sum(total_part)
    count = jnp.sum(count_part)
    # Deviation from PyTorch: with zero valid pairs this returns 0.0 instead of NaN.
    safe_mean = total / jnp.maximum(count, 1.0)
    return jnp.where(count > 0, LOSS_WEIGHT * safe_mean, 0.0)


def pairank_loss_reference(cls_score, labels, true_rank, vec_seen, vec_unseen):
    """Pure-JAX (eager, host-side fg selection) reference reproducing the PyTorch semantics."""
    rank_value, rank_index = true_rank
    labels_np = np.asarray(labels)
    fg_idx = np.nonzero(labels_np != 0)[0]
    fg_labels = labels_np[fg_idx] - 1
    fg_score = jnp.asarray(cls_score)[fg_idx].astype(jnp.float32)

    scores = jax.nn.softmax(fg_score, axis=1)
    scores_pre = scores @ jnp.asarray(vec_seen, jnp.float32).T
    fg_vec = jnp.concatenate([vec_seen[:, 1:], vec_unseen[:, 1:]], axis=1)
    scores_all = scores_pre @ fg_vec.astype(jnp.float32)

    ri = jnp.asarray(rank_index)[fg_labels][:, :TOPK]
    rv = jnp.asarray(rank_value)[fg_labels][:, :TOPK].astype(jnp.float32)
    y_pred = jnp.take_along_axis(scores_all, ri, axis=1)
    y_true = rv

    td = y_true[:, :, None] - y_true[:, None, :]
    pd = y_pred[:, :, None] - y_pred[:, None, :]
    mask = td > 0.0
    w = jnp.abs(2.0 * (1.0 / (1.0 + jnp.exp(-td / SCALE))) - 1.0)
    bce = jnp.maximum(pd, 0.0) - pd + jnp.log(1.0 + jnp.exp(-jnp.abs(pd)))
    total = jnp.sum(jnp.where(mask, w * bce, 0.0))
    count = jnp.sum(mask.astype(jnp.float32))
    return LOSS_WEIGHT * total / count


if __name__ == "__main__":
    key = jax.random.PRNGKey(0)
    k1, k2, k3, k4, k5, k6 = jax.random.split(key, 6)

    N = 16            # anchors
    C = 8             # seen classes (col 0 = background) == cls_score width
    D = 32            # word-vector dim
    CU = 5            # unseen classes incl. bg column
    C_ALL = (C - 1) + (CU - 1)   # 11 foreground classes total

    cls_score = jax.random.normal(k1, (N, C), dtype=jnp.float32)
    labels = jax.random.randint(k2, (N,), 0, C, dtype=jnp.int32)
    labels = labels.at[0].set(1)  # guarantee at least one foreground sample

    # deterministic synthetic "parameters" / rank tables
    vec_seen = jax.random.normal(k3, (D, C), dtype=jnp.float32)
    vec_unseen = jax.random.normal(k4, (D, CU), dtype=jnp.float32)
    # per seen fg class: descending rank values and a permutation of all fg classes
    rank_value = jnp.sort(jax.random.uniform(k5, (C - 1, C_ALL)), axis=1)[:, ::-1]
    perm_keys = jax.random.split(k6, C - 1)
    rank_index = jnp.stack(
        [jax.random.permutation(pk, C_ALL) for pk in perm_keys]).astype(jnp.int32)

    loss = pairank_loss(cls_score, labels, (rank_value, rank_index),
                        vec_seen, vec_unseen)
    loss = jax.block_until_ready(loss)

    ref = pairank_loss_reference(cls_score, labels, (rank_value, rank_index),
                                 vec_seen, vec_unseen)
    ref = jax.block_until_ready(ref)

    assert np.isfinite(float(loss))
    # tolerance covers approx reciprocal (~2^-12), tanh/sigmoid reformulation and
    # the W re-association / different reduction order
    np.testing.assert_allclose(np.asarray(loss), np.asarray(ref),
                               rtol=2e-3, atol=1e-5)
    print("KERNEL_OK")
</pallas_src>

<mosaic_0001>
module attributes {stable_mosaic.version = 11 : i64} {
  func.func @pairank_loss_kernel(%arg0: i32, %arg1: memref<8x128xf32, #tpu.memory_space<vmem>>, %arg2: memref<16x8xf32, #tpu.memory_space<vmem>>, %arg3: memref<5x128xf32, #tpu.memory_space<vmem>>, %arg4: memref<5x128xi32, #tpu.memory_space<vmem>>, %arg5: memref<1x128xf32, #tpu.memory_space<vmem>>, %arg6: memref<1x128xf32, #tpu.memory_space<vmem>>) attributes {dimension_semantics = [#tpu.dimension_semantics<parallel>], iteration_bounds = array<i64: 1>, scalar_prefetch = 0 : i64, scratch_operands = 0 : i64, tpu.core_type = #tpu.core_type<tc>, window_params = [{transform_indices = @transform_0, window_bounds = array<i64: 8, 128>}, {pipeline_mode = #tpu.pipeline_mode<synchronous>, transform_indices = @transform_1, window_bounds = array<i64: 16, 8>}, {transform_indices = @transform_2, window_bounds = array<i64: 5, 128>}, {transform_indices = @transform_3, window_bounds = array<i64: 5, 128>}, {transform_indices = @transform_4, window_bounds = array<i64: 1, 128>}, {transform_indices = @transform_5, window_bounds = array<i64: 1, 128>}]} {
    %c0 = arith.constant 0 : index
    %c0_0 = arith.constant 0 : index
    %0 = vector.load %arg1[%c0, %c0_0] : memref<8x128xf32, #tpu.memory_space<vmem>>, vector<8x128xf32>
    %cst = arith.constant dense<0xFF800000> : vector<128xf32>
    %1 = vector.multi_reduction <maximumf>, %0, %cst [0] : vector<8x128xf32> to vector<128xf32>
    %2 = vector.shape_cast %1 : vector<128xf32> to vector<1x128xf32>
    %3 = vector.broadcast %2 : vector<1x128xf32> to vector<8x128xf32>
    %4 = arith.subf %0, %3 : vector<8x128xf32>
    %5 = math.exp %4 : vector<8x128xf32>
    %cst_1 = arith.constant dense<0.000000e+00> : vector<128xf32>
    %6 = vector.multi_reduction <add>, %5, %cst_1 [0] : vector<8x128xf32> to vector<128xf32>
    %7 = vector.shape_cast %6 : vector<128xf32> to vector<1x128xf32>
    %8 = tpu.reciprocal %7 {approx = true} : vector<1x128xf32> -> vector<1x128xf32>
    %9 = vector.broadcast %8 : vector<1x128xf32> to vector<8x128xf32>
    %10 = arith.mulf %5, %9 : vector<8x128xf32>
    %c0_2 = arith.constant 0 : index
    %c0_3 = arith.constant 0 : index
    %11 = vector.load %arg2[%c0_2, %c0_3] : memref<16x8xf32, #tpu.memory_space<vmem>>, vector<16x8xf32>
    %cst_4 = arith.constant dense<0.000000e+00> : vector<16x128xf32>
    %12 = tpu.matmul %11, %10, %cst_4 {dimension_numbers = #tpu.dot_dimension_numbers<[1], [0], [0], [1], [0, 0, 1, 1], [], []>} : vector<16x8xf32>, vector<8x128xf32>, vector<16x128xf32> -> vector<16x128xf32>
    %c0_5 = arith.constant 0 : index
    %c0_6 = arith.constant 0 : index
    %13 = vector.load %arg4[%c0_5, %c0_6] : memref<5x128xi32, #tpu.memory_space<vmem>>, vector<5x128xi32>
    %c0_7 = arith.constant 0 : index
    %c0_8 = arith.constant 0 : index
    %14 = vector.load %arg3[%c0_7, %c0_8] : memref<5x128xf32, #tpu.memory_space<vmem>>, vector<5x128xf32>
    %cst_9 = arith.constant 0.000000e+00 : f32
    %15 = vector.broadcast %cst_9 : f32 to vector<5x128xf32>
    %c0_i32 = arith.constant 0 : i32
    %16 = vector.broadcast %c0_i32 : i32 to vector<5x128xi32>
    %17 = arith.cmpi eq, %13, %16 : vector<5x128xi32>
    %18 = vector.extract_strided_slice %12 {offsets = [0, 0], sizes = [1, 128], strides = [1, 1]} : vector<16x128xf32> to vector<1x128xf32>
    %19 = vector.shape_cast %18 : vector<1x128xf32> to vector<1x128xf32>
    %20 = vector.broadcast %19 : vector<1x128xf32> to vector<5x128xf32>
    %21 = arith.select %17, %20, %15 : vector<5x128xi1>, vector<5x128xf32>
    %c1_i32 = arith.constant 1 : i32
    %22 = vector.broadcast %c1_i32 : i32 to vector<5x128xi32>
    %23 = arith.cmpi eq, %13, %22 : vector<5x128xi32>
    %24 = vector.extract_strided_slice %12 {offsets = [1, 0], sizes = [1, 128], strides = [1, 1]} : vector<16x128xf32> to vector<1x128xf32>
    %25 = vector.shape_cast %24 : vector<1x128xf32> to vector<1x128xf32>
    %26 = vector.broadcast %25 : vector<1x128xf32> to vector<5x128xf32>
    %27 = arith.select %23, %26, %21 : vector<5x128xi1>, vector<5x128xf32>
    %c2_i32 = arith.constant 2 : i32
    %28 = vector.broadcast %c2_i32 : i32 to vector<5x128xi32>
    %29 = arith.cmpi eq, %13, %28 : vector<5x128xi32>
    %30 = vector.extract_strided_slice %12 {offsets = [2, 0], sizes = [1, 128], strides = [1, 1]} : vector<16x128xf32> to vector<1x128xf32>
    %31 = vector.shape_cast %30 : vector<1x128xf32> to vector<1x128xf32>
    %32 = vector.broadcast %31 : vector<1x128xf32> to vector<5x128xf32>
    %33 = arith.select %29, %32, %27 : vector<5x128xi1>, vector<5x128xf32>
    %c3_i32 = arith.constant 3 : i32
    %34 = vector.broadcast %c3_i32 : i32 to vector<5x128xi32>
    %35 = arith.cmpi eq, %13, %34 : vector<5x128xi32>
    %36 = vector.extract_strided_slice %12 {offsets = [3, 0], sizes = [1, 128], strides = [1, 1]} : vector<16x128xf32> to vector<1x128xf32>
    %37 = vector.shape_cast %36 : vector<1x128xf32> to vector<1x128xf32>
    %38 = vector.broadcast %37 : vector<1x128xf32> to vector<5x128xf32>
    %39 = arith.select %35, %38, %33 : vector<5x128xi1>, vector<5x128xf32>
    %c4_i32 = arith.constant 4 : i32
    %40 = vector.broadcast %c4_i32 : i32 to vector<5x128xi32>
    %41 = arith.cmpi eq, %13, %40 : vector<5x128xi32>
    %42 = vector.extract_strided_slice %12 {offsets = [4, 0], sizes = [1, 128], strides = [1, 1]} : vector<16x128xf32> to vector<1x128xf32>
    %43 = vector.shape_cast %42 : vector<1x128xf32> to vector<1x128xf32>
    %44 = vector.broadcast %43 : vector<1x128xf32> to vector<5x128xf32>
    %45 = arith.select %41, %44, %39 : vector<5x128xi1>, vector<5x128xf32>
    %c5_i32 = arith.constant 5 : i32
    %46 = vector.broadcast %c5_i32 : i32 to vector<5x128xi32>
    %47 = arith.cmpi eq, %13, %46 : vector<5x128xi32>
    %48 = vector.extract_strided_slice %12 {offsets = [5, 0], sizes = [1, 128], strides = [1, 1]} : vector<16x128xf32> to vector<1x128xf32>
    %49 = vector.shape_cast %48 : vector<1x128xf32> to vector<1x128xf32>
    %50 = vector.broadcast %49 : vector<1x128xf32> to vector<5x128xf32>
    %51 = arith.select %47, %50, %45 : vector<5x128xi1>, vector<5x128xf32>
    %c6_i32 = arith.constant 6 : i32
    %52 = vector.broadcast %c6_i32 : i32 to vector<5x128xi32>
    %53 = arith.cmpi eq, %13, %52 : vector<5x128xi32>
    %54 = vector.extract_strided_slice %12 {offsets = [6, 0], sizes = [1, 128], strides = [1, 1]} : vector<16x128xf32> to vector<1x128xf32>
    %55 = vector.shape_cast %54 : vector<1x128xf32> to vector<1x128xf32>
    %56 = vector.broadcast %55 : vector<1x128xf32> to vector<5x128xf32>
    %57 = arith.select %53, %56, %51 : vector<5x128xi1>, vector<5x128xf32>
    %c7_i32 = arith.constant 7 : i32
    %58 = vector.broadcast %c7_i32 : i32 to vector<5x128xi32>
    %59 = arith.cmpi eq, %13, %58 : vector<5x128xi32>
    %60 = vector.extract_strided_slice %12 {offsets = [7, 0], sizes = [1, 128], strides = [1, 1]} : vector<16x128xf32> to vector<1x128xf32>
    %61 = vector.shape_cast %60 : vector<1x128xf32> to vector<1x128xf32>
    %62 = vector.broadcast %61 : vector<1x128xf32> to vector<5x128xf32>
    %63 = arith.select %59, %62, %57 : vector<5x128xi1>, vector<5x128xf32>
    %c8_i32 = arith.constant 8 : i32
    %64 = vector.broadcast %c8_i32 : i32 to vector<5x128xi32>
    %65 = arith.cmpi eq, %13, %64 : vector<5x128xi32>
    %66 = vector.extract_strided_slice %12 {offsets = [8, 0], sizes = [1, 128], strides = [1, 1]} : vector<16x128xf32> to vector<1x128xf32>
    %67 = vector.shape_cast %66 : vector<1x128xf32> to vector<1x128xf32>
    %68 = vector.broadcast %67 : vector<1x128xf32> to vector<5x128xf32>
    %69 = arith.select %65, %68, %63 : vector<5x128xi1>, vector<5x128xf32>
    %c9_i32 = arith.constant 9 : i32
    %70 = vector.broadcast %c9_i32 : i32 to vector<5x128xi32>
    %71 = arith.cmpi eq, %13, %70 : vector<5x128xi32>
    %72 = vector.extract_strided_slice %12 {offsets = [9, 0], sizes = [1, 128], strides = [1, 1]} : vector<16x128xf32> to vector<1x128xf32>
    %73 = vector.shape_cast %72 : vector<1x128xf32> to vector<1x128xf32>
    %74 = vector.broadcast %73 : vector<1x128xf32> to vector<5x128xf32>
    %75 = arith.select %71, %74, %69 : vector<5x128xi1>, vector<5x128xf32>
    %c10_i32 = arith.constant 10 : i32
    %76 = vector.broadcast %c10_i32 : i32 to vector<5x128xi32>
    %77 = arith.cmpi eq, %13, %76 : vector<5x128xi32>
    %78 = vector.extract_strided_slice %12 {offsets = [10, 0], sizes = [1, 128], strides = [1, 1]} : vector<16x128xf32> to vector<1x128xf32>
    %79 = vector.shape_cast %78 : vector<1x128xf32> to vector<1x128xf32>
    %80 = vector.broadcast %79 : vector<1x128xf32> to vector<5x128xf32>
    %81 = arith.select %77, %80, %75 : vector<5x128xi1>, vector<5x128xf32>
    %82 = vector.shape_cast %14 : vector<5x128xf32> to vector<5x1x128xf32>
    %83 = vector.shape_cast %14 : vector<5x128xf32> to vector<1x5x128xf32>
    %84 = vector.broadcast %82 : vector<5x1x128xf32> to vector<5x5x128xf32>
    %85 = vector.broadcast %83 : vector<1x5x128xf32> to vector<5x5x128xf32>
    %86 = arith.subf %84, %85 : vector<5x5x128xf32>
    %87 = vector.shape_cast %81 : vector<5x128xf32> to vector<5x1x128xf32>
    %88 = vector.shape_cast %81 : vector<5x128xf32> to vector<1x5x128xf32>
    %89 = vector.broadcast %87 : vector<5x1x128xf32> to vector<5x5x128xf32>
    %90 = vector.broadcast %88 : vector<1x5x128xf32> to vector<5x5x128xf32>
    %91 = arith.subf %89, %90 : vector<5x5x128xf32>
    %cst_10 = arith.constant 5.000000e+00 : f32
    %92 = vector.broadcast %cst_10 : f32 to vector<5x5x128xf32>
    %93 = arith.mulf %86, %92 : vector<5x5x128xf32>
    %94 = math.tanh %93 : vector<5x5x128xf32>
    %cst_11 = arith.constant 0.000000e+00 : f32
    %95 = vector.broadcast %cst_11 : f32 to vector<5x5x128xf32>
    %96 = arith.maximumf %94, %95 : vector<5x5x128xf32>
    %cst_12 = arith.constant 0.000000e+00 : f32
    %97 = vector.broadcast %cst_12 : f32 to vector<5x5x128xf32>
    %98 = arith.subf %97, %91 : vector<5x5x128xf32>
    %cst_13 = arith.constant 0.000000e+00 : f32
    %99 = vector.broadcast %cst_13 : f32 to vector<5x5x128xf32>
    %100 = arith.maximumf %98, %99 : vector<5x5x128xf32>
    %101 = math.absf %91 : vector<5x5x128xf32>
    %cst_14 = arith.constant 0.000000e+00 : f32
    %102 = vector.broadcast %cst_14 : f32 to vector<5x5x128xf32>
    %103 = arith.subf %102, %101 : vector<5x5x128xf32>
    %104 = math.exp %103 : vector<5x5x128xf32>
    %cst_15 = arith.constant 1.000000e+00 : f32
    %105 = vector.broadcast %cst_15 : f32 to vector<5x5x128xf32>
    %106 = arith.addf %105, %104 : vector<5x5x128xf32>
    %107 = math.log %106 : vector<5x5x128xf32>
    %108 = arith.addf %100, %107 : vector<5x5x128xf32>
    %109 = arith.mulf %96, %108 : vector<5x5x128xf32>
    %cst_16 = arith.constant dense<0.000000e+00> : vector<5x128xf32>
    %110 = vector.multi_reduction <add>, %109, %cst_16 [0] : vector<5x5x128xf32> to vector<5x128xf32>
    %cst_17 = arith.constant dense<0.000000e+00> : vector<128xf32>
    %111 = vector.multi_reduction <add>, %110, %cst_17 [0] : vector<5x128xf32> to vector<128xf32>
    %112 = vector.shape_cast %111 : vector<128xf32> to vector<1x128xf32>
    %c0_18 = arith.constant 0 : index
    %c0_19 = arith.constant 0 : index
    %113 = vector.load %arg5[%c0_18, %c0_19] : memref<1x128xf32, #tpu.memory_space<vmem>>, vector<1x128xf32>
    tpu.vector_store %arg5[%c0_18, %c0_19], %112 {strides = array<i32>} : memref<1x128xf32, #tpu.memory_space<vmem>>, vector<1x128xf32>,
    %cst_20 = arith.constant 0.000000e+00 : f32
    %114 = vector.broadcast %cst_20 : f32 to vector<5x5x128xf32>
    %115 = arith.cmpf ogt, %86, %114 : vector<5x5x128xf32>
    %116 = arith.extui %115 : vector<5x5x128xi1> to vector<5x5x128xi32>
    %117 = arith.sitofp %116 : vector<5x5x128xi32> to vector<5x5x128xf32>
    %cst_21 = arith.constant dense<0.000000e+00> : vector<5x128xf32>
    %118 = vector.multi_reduction <add>, %117, %cst_21 [0] : vector<5x5x128xf32> to vector<5x128xf32>
    %cst_22 = arith.constant dense<0.000000e+00> : vector<128xf32>
    %119 = vector.multi_reduction <add>, %118, %cst_22 [0] : vector<5x128xf32> to vector<128xf32>
    %120 = vector.shape_cast %119 : vector<128xf32> to vector<1x128xf32>
    %c0_23 = arith.constant 0 : index
    %c0_24 = arith.constant 0 : index
    %121 = vector.load %arg6[%c0_23, %c0_24] : memref<1x128xf32, #tpu.memory_space<vmem>>, vector<1x128xf32>
    tpu.vector_store %arg6[%c0_23, %c0_24], %120 {strides = array<i32>} : memref<1x128xf32, #tpu.memory_space<vmem>>, vector<1x128xf32>,
    return
  }
  func.func @transform_0(%arg0: i32) -> (i32, i32) {
    %c0_i32 = arith.constant 0 : i32
    %c0_i32_0 = arith.constant 0 : i32
    return %c0_i32, %arg0 : i32, i32
  }
  func.func @transform_1(%arg0: i32) -> (i32, i32) {
    %c0_i32 = arith.constant 0 : i32
    %c0_i32_0 = arith.constant 0 : i32
    %c0_i32_1 = arith.constant 0 : i32
    return %c0_i32, %c0_i32_0 : i32, i32
  }
  func.func @transform_2(%arg0: i32) -> (i32, i32) {
    %c0_i32 = arith.constant 0 : i32
    %c0_i32_0 = arith.constant 0 : i32
    return %c0_i32, %arg0 : i32, i32
  }
  func.func @transform_3(%arg0: i32) -> (i32, i32) {
    %c0_i32 = arith.constant 0 : i32
    %c0_i32_0 = arith.constant 0 : i32
    return %c0_i32, %arg0 : i32, i32
  }
  func.func @transform_4(%arg0: i32) -> (i32, i32) {
    %c0_i32 = arith.constant 0 : i32
    %c0_i32_0 = arith.constant 0 : i32
    return %c0_i32, %arg0 : i32, i32
  }
  func.func @transform_5(%arg0: i32) -> (i32, i32) {
    %c0_i32 = arith.constant 0 : i32
    %c0_i32_0 = arith.constant 0 : i32
    return %c0_i32, %arg0 : i32, i32
  }
}

</mosaic_0001>

<llo_original>
// kernel: pairank_loss.1
$region0: #{pairank_loss.1}
  #allocation0 [shape = 'u32[]', space=smem, size = 0x4, offset = 0x4, fixed_abs, tag = 'smem constant byte address 0x4 - core index']
  #allocation1 [shape = 'u32[144,128]{1,0:T(1,128)}', space=vmem, size = 0x12000, scoped, tag = 'internal scratch']
  %s0 = inlined_call_operand.vmem [shape: f32[8,128], index: 0, kind: input, shape index: {}]
  %s1 = inlined_call_operand.vmem [shape: f32[16,8], index: 1, kind: input, shape index: {}]
  %s2 = inlined_call_operand.vmem [shape: f32[5,128], index: 2, kind: input, shape index: {}]
  %s3 = inlined_call_operand.vmem [shape: s32[5,128], index: 3, kind: input, shape index: {}]
  %s4 = inlined_call_operand.vmem [shape: f32[1,128], index: 4, kind: output, shape index: {0}]
  %s5 = inlined_call_operand.vmem [shape: f32[1,128], index: 5, kind: output, shape index: {1}]
  %6 = xla_tuple %s4, %s5
  %s7 = sld [smem:[#allocation0]]
  $region34: #{pairank_loss.1} parent=0
    _
  %s9 = ssub.s32 1, %s7
  %s10 = scalar_select 0, %s9, %s7
  // Predicated region
  $region2: #{pairank_loss.1} parent=0 // pred_check
    _
  $region3: #{pairank_loss.1} parent=0 // pred_check_branch
    %12 = sbr.rel (0) target = $region5
  $region4: #{pairank_loss.1} parent=0 // pred_region
    _
  $region5: #{pairank_loss.1} parent=0 // pred_fallthru
    _
  // Predicated region
  $region6: #{pairank_loss.1} parent=0 // pred_check
    _
  $region7: #{pairank_loss.1} parent=0 // pred_check_branch
    %14 = sbr.rel (0) target = $region9
  $region8: #{pairank_loss.1} parent=0 // pred_region
    _
  $region9: #{pairank_loss.1} parent=0 // pred_fallthru
    _
  // Predicated region
  $region10: #{pairank_loss.1} parent=0 // pred_check
    _
  $region11: #{pairank_loss.1} parent=0 // pred_check_branch
    %16 = sbr.rel (0) target = $region13
  $region12: #{pairank_loss.1} parent=0 // pred_region
    _
  $region13: #{pairank_loss.1} parent=0 // pred_fallthru
    _
  // Predicated region
  $region14: #{pairank_loss.1} parent=0 // pred_check
    _
  $region15: #{pairank_loss.1} parent=0 // pred_check_branch
    %18 = sbr.rel (0) target = $region17
  $region16: #{pairank_loss.1} parent=0 // pred_region
    _
  $region17: #{pairank_loss.1} parent=0 // pred_fallthru
    _
  %v19 = vld [vmem:[%s0] sm:$0xff]
  %v20 = vrot.slane %v19, 4
  %v21 = vmax.f32 %v19, %v20
  %v22 = vrot.slane %v21, 2
  %v23 = vmax.f32 %v21, %v22
  %v24 = vrot.slane %v23, 1
  %v25 = vmax.f32 %v23, %v24
  %v26 = vsub.f32 %v19, %v25
  %v27 = vmul.f32 %v26, 1.442695
  %v28 = vpow.pop %v27
  %v29 = vrot.slane %v28, 4
  %v30 = vadd.f32 %v28, %v29
  %v31 = vrot.slane %v30, 2
  %v32 = vadd.f32 %v30, %v31
  %v33 = vrot.slane %v32, 1
  %v34 = vadd.f32 %v32, %v33
  %v35 = vrcp.pop %v34
  %v36 = vmul.f32 %v28, %v35
  %v37 = vld [vmem:[%s1] sm:$0xff]
  %v38 = vld [vmem:[%s1 + $0x8] sm:$0xff]
  %vm39 = vcmask 64512
  %v41 = vsel %vm39, %v37, 0
  %v44 = vsel %vm39, %v38, 0
  %46 = vmatprep.subr.mxu0 0.0
  %47 = vmatpush1.msra.mxu0 %v36
  %48 = vmatprep.subr.mxu0 0.0
  %49 = vmatpush1.msra.mxu0 0.0
  %50 = vmatprep.subr.mxu0 0.0
  %51 = vmatpush1.msra.mxu0 0.0
  %52 = vmatprep.subr.mxu0 0.0
  %53 = vmatpush1.msra.mxu0 0.0
  %54 = vmatprep.subr.mxu0 0.0
  %55 = vmatpush1.msra.mxu0 0.0
  %56 = vmatprep.subr.mxu0 0.0
  %57 = vmatpush1.msra.mxu0 0.0
  %58 = vmatprep.subr.mxu0 0.0
  %59 = vmatpush1.msra.mxu0 0.0
  %60 = vmatprep.subr.mxu0 0.0
  %61 = vmatpush1.msra.mxu0 0.0
  %62 = vmatprep.subr.mxu0 0.0
  %63 = vmatpush1.msra.mxu0 0.0
  %64 = vmatprep.subr.mxu0 0.0
  %65 = vmatpush1.msra.mxu0 0.0
  %66 = vmatprep.subr.mxu0 0.0
  %67 = vmatpush1.msra.mxu0 0.0
  %68 = vmatprep.subr.mxu0 0.0
  %69 = vmatpush1.msra.mxu0 0.0
  %70 = vmatprep.subr.mxu0 0.0
  %71 = vmatpush1.msra.mxu0 0.0
  %72 = vmatprep.subr.mxu0 0.0
  %73 = vmatpush1.msra.mxu0 0.0
  %74 = vmatprep.subr.mxu0 0.0
  %75 = vmatpush1.msra.mxu0 0.0
  %76 = vmatprep.subr.mxu0 0.0
  %77 = vmatpush1.msra.mxu0 0.0
  %78 = vmatprep.subr.mxu0 0.0
  %79 = vmatpush1.msra.mxu0 0.0
  %80 = vmatprep.subr.mxu0 0.0
  %81 = vmatpush1.msra.mxu0 0.0
  %82 = vmatprep.subr.mxu0 0.0
  %83 = vmatpush1.msra.mxu0 0.0
  %84 = vmatprep.subr.mxu0 0.0
  %85 = vmatpush1.msra.mxu0 0.0
  %86 = vmatprep.subr.mxu0 0.0
  %87 = vmatpush1.msra.mxu0 0.0
  %88 = vmatprep.subr.mxu0 0.0
  %89 = vmatpush1.msra.mxu0 0.0
  %90 = vmatprep.subr.mxu0 0.0
  %91 = vmatpush1.msra.mxu0 0.0
  %92 = vmatprep.subr.mxu0 0.0
  %93 = vmatpush1.msra.mxu0 0.0
  %94 = vmatprep.subr.mxu0 0.0
  %95 = vmatpush1.msra.mxu0 0.0
  %96 = vmatprep.subr.mxu0 0.0
  %97 = vmatpush1.msra.mxu0 0.0
  %98 = vmatprep.subr.mxu0 0.0
  %99 = vmatpush1.msra.mxu0 0.0
  %100 = vmatprep.subr.mxu0 0.0
  %101 = vmatpush1.msra.mxu0 0.0
  %102 = vmatprep.subr.mxu0 0.0
  %103 = vmatpush1.msra.mxu0 0.0
  %104 = vmatprep.subr.mxu0 0.0
  %105 = vmatpush1.msra.mxu0 0.0
  %106 = vmatprep.subr.mxu0 0.0
  %107 = vmatpush1.msra.mxu0 0.0
  %108 = vmatprep.subr.mxu0 0.0
  %109 = vmatpush1.msra.mxu0 0.0
  %110 = vmatprep.mubr.f32.mxu0 0.0
  %111 = vmatmul.mubr.f32.gmra.mrb[0].mxu0 %v41
  %v112 = vpop.f32.mrb[0].mxu0
  %v113 = vadd.f32 0.0, %v112
  %v114 = vpop.f32.mrb[0].mxu0
  %115 = vmatprep.mubr.f32.mxu0 0.0
  %116 = vmatmul.mubr.f32.gmra.mrb[0].mxu0 %v44
  %v117 = vpop.f32.mrb[0].mxu0
  %v118 = vadd.f32 0.0, %v117
  %v119 = vpop.f32.mrb[0].mxu0
  %120 = vdwg.mxu0
  %v121 = vld [vmem:[%s3] sm:$0x1f]
  %v122 = vld [vmem:[%s2] sm:$0x1f]
  %vm123 = vcmp.eq.s32.totalorder %v121, 0
  %v124 = vlaneseq
  %v125 = vshrl.u32 %v124, 7
  %v126 = vsub.s32 0, %v125
  %v127 = vrot.slane %v113, %v126
  %v128 = vsel %vm123, %v127, 0.0
  %vm129 = vcmp.eq.s32.totalorder %v121, 1
  %v130 = vlaneseq
  %v131 = vshrl.u32 %v130, 7
  %v132 = vsub.s32 1, %v131
  %v133 = vrot.slane %v113, %v132
  %v134 = vsel %vm129, %v133, %v128
  %vm135 = vcmp.eq.s32.totalorder %v121, 2
  %v136 = vlaneseq
  %v137 = vshrl.u32 %v136, 7
  %v138 = vsub.s32 2, %v137
  %v139 = vrot.slane %v113, %v138
  %v140 = vsel %vm135, %v139, %v134
  %vm141 = vcmp.eq.s32.totalorder %v121, 3
  %v142 = vlaneseq
  %v143 = vshrl.u32 %v142, 7
  %v144 = vsub.s32 3, %v143
  %v145 = vrot.slane %v113, %v144
  %v146 = vsel %vm141, %v145, %v140
  %vm147 = vcmp.eq.s32.totalorder %v121, 4
  %v148 = vlaneseq
  %v149 = vshrl.u32 %v148, 7
  %v150 = vsub.s32 4, %v149
  %v151 = vrot.slane %v113, %v150
  %v152 = vsel %vm147, %v151, %v146
  %vm153 = vcmp.eq.s32.totalorder %v121, 5
  %v154 = vlaneseq
  %v155 = vshrl.u32 %v154, 7
  %v156 = vsub.s32 5, %v155
  %v157 = vrot.slane %v113, %v156
  %v158 = vsel %vm153, %v157, %v152
  %vm159 = vcmp.eq.s32.totalorder %v121, 6
  %v160 = vlaneseq
  %v161 = vshrl.u32 %v160, 7
  %v162 = vsub.s32 6, %v161
  %v163 = vrot.slane %v113, %v162
  %v164 = vsel %vm159, %v163, %v158
  %vm165 = vcmp.eq.s32.totalorder %v121, 7
  %v166 = vlaneseq
  %v167 = vshrl.u32 %v166, 7
  %v168 = vsub.s32 7, %v167
  %v169 = vrot.slane %v113, %v168
  %v170 = vsel %vm165, %v169, %v164
  %vm171 = vcmp.eq.s32.totalorder %v121, 8
  %v172 = vlaneseq
  %v173 = vshrl.u32 %v172, 7
  %v174 = vsub.s32 0, %v173
  %v175 = vrot.slane %v118, %v174
  %v176 = vsel %vm171, %v175, %v170
  %vm177 = vcmp.eq.s32.totalorder %v121, 9
  %v178 = vlaneseq
  %v179 = vshrl.u32 %v178, 7
  %v180 = vsub.s32 1, %v179
  %v181 = vrot.slane %v118, %v180
  %v182 = vsel %vm177, %v181, %v176
  %vm183 = vcmp.eq.s32.totalorder %v121, 10
  %v184 = vlaneseq
  %v185 = vshrl.u32 %v184, 7
  %v186 = vsub.s32 2, %v185
  %v187 = vrot.slane %v118, %v186
  %v188 = vsel %vm183, %v187, %v182
  %v190 = vcombine.high %v122, %v122
  %v192 = vunpack.c.l.s4 1966171168
  %v193 = vunpack.c.0.s8 %v192
  %v194 = vlaneseq
  %v195 = vshrl.u32 %v194, 7
  %v196 = vsub.s32 %v193, %v195
  %v197 = vrot.slane %v122, %v196
  %v199 = vunpack.c.l.s4 1966171168
  %v200 = vunpack.c.0.s8 %v199
  %v201 = vlaneseq
  %v202 = vshrl.u32 %v201, 7
  %v203 = vsub.s32 %v200, %v202
  %v204 = vrot.slane %v190, %v203
  %v205 = vcombine.high %v197, %v197
  %v207 = vunpack.c.l.s4 1966171168
  %v208 = vunpack.c.0.s8 %v207
  %v209 = vlaneseq
  %v210 = vshrl.u32 %v209, 7
  %v211 = vsub.s32 %v208, %v210
  %v212 = vrot.slane %v197, %v211
  %v214 = vunpack.c.l.s4 1966171168
  %v215 = vunpack.c.0.s8 %v214
  %v216 = vlaneseq
  %v217 = vshrl.u32 %v216, 7
  %v218 = vsub.s32 %v215, %v217
  %v219 = vrot.slane %v204, %v218
  %v221 = vunpack.c.l.s4 1966171168
  %v222 = vunpack.c.0.s8 %v221
  %v223 = vlaneseq
  %v224 = vshrl.u32 %v223, 7
  %v225 = vsub.s32 %v222, %v224
  %v226 = vrot.slane %v205, %v225
  %v227 = vcombine.high %v212, %v212
  %v228 = vcombine.high %v226, %v226
  %v229 = vlaneseq
  %v230 = vshrl.u32 %v229, 7
  %v231 = vsub.s32 0, %v230
  %v232 = vrot.slane %v212, %v231
  %v233 = vlaneseq
  %v234 = vshrl.u32 %v233, 7
  %v235 = vsub.s32 0, %v234
  %v236 = vrot.slane %v226, %v235
  %v237 = vlaneseq
  %v238 = vshrl.u32 %v237, 7
  %v239 = vsub.s32 0, %v238
  %v240 = vrot.slane %v227, %v239
  %v241 = vlaneseq
  %v242 = vshrl.u32 %v241, 7
  %v243 = vsub.s32 0, %v242
  %v244 = vrot.slane %v228, %v243
  %v245 = vlaneseq
  %v246 = vshrl.u32 %v245, 7
  %v247 = vsub.s32 0, %v246
  %v248 = vrot.slane %v219, %v247
  %v254 = vsub.f32 %v232, %v122
  %v255 = vsub.f32 %v236, %v122
  %v256 = vsub.f32 %v240, %v122
  %v257 = vsub.f32 %v244, %v122
  %v258 = vsub.f32 %v248, %v122
  %v260 = vcombine.high %v188, %v188
  %v262 = vunpack.c.l.s4 1966171168
  %v263 = vunpack.c.0.s8 %v262
  %v264 = vlaneseq
  %v265 = vshrl.u32 %v264, 7
  %v266 = vsub.s32 %v263, %v265
  %v267 = vrot.slane %v188, %v266
  %v269 = vunpack.c.l.s4 1966171168
  %v270 = vunpack.c.0.s8 %v269
  %v271 = vlaneseq
  %v272 = vshrl.u32 %v271, 7
  %v273 = vsub.s32 %v270, %v272
  %v274 = vrot.slane %v260, %v273
  %v275 = vcombine.high %v267, %v267
  %v277 = vunpack.c.l.s4 1966171168
  %v278 = vunpack.c.0.s8 %v277
  %v279 = vlaneseq
  %v280 = vshrl.u32 %v279, 7
  %v281 = vsub.s32 %v278, %v280
  %v282 = vrot.slane %v267, %v281
  %v284 = vunpack.c.l.s4 1966171168
  %v285 = vunpack.c.0.s8 %v284
  %v286 = vlaneseq
  %v287 = vshrl.u32 %v286, 7
  %v288 = vsub.s32 %v285, %v287
  %v289 = vrot.slane %v274, %v288
  %v291 = vunpack.c.l.s4 1966171168
  %v292 = vunpack.c.0.s8 %v291
  %v293 = vlaneseq
  %v294 = vshrl.u32 %v293, 7
  %v295 = vsub.s32 %v292, %v294
  %v296 = vrot.slane %v275, %v295
  %v297 = vcombine.high %v282, %v282
  %v298 = vcombine.high %v296, %v296
  %v299 = vlaneseq
  %v300 = vshrl.u32 %v299, 7
  %v301 = vsub.s32 0, %v300
  %v302 = vrot.slane %v282, %v301
  %v303 = vlaneseq
  %v304 = vshrl.u32 %v303, 7
  %v305 = vsub.s32 0, %v304
  %v306 = vrot.slane %v296, %v305
  %v307 = vlaneseq
  %v308 = vshrl.u32 %v307, 7
  %v309 = vsub.s32 0, %v308
  %v310 = vrot.slane %v297, %v309
  %v311 = vlaneseq
  %v312 = vshrl.u32 %v311, 7
  %v313 = vsub.s32 0, %v312
  %v314 = vrot.slane %v298, %v313
  %v315 = vlaneseq
  %v316 = vshrl.u32 %v315, 7
  %v317 = vsub.s32 0, %v316
  %v318 = vrot.slane %v289, %v317
  %v324 = vsub.f32 %v302, %v188
  %v325 = vsub.f32 %v306, %v188
  %v326 = vsub.f32 %v310, %v188
  %v327 = vsub.f32 %v314, %v188
  %v328 = vsub.f32 %v318, %v188
  %v329 = vmul.f32 %v254, 5.0
  %v330 = vmul.f32 %v255, 5.0
  %v331 = vmul.f32 %v256, 5.0
  %v332 = vmul.f32 %v257, 5.0
  %v333 = vmul.f32 %v258, 5.0
  %v334 = vtanh.pop %v329
  %v335 = vtanh.pop %v330
  %v336 = vtanh.pop %v331
  %v337 = vtanh.pop %v332
  %v338 = vtanh.pop %v333
  %v339 = vmax.f32 %v334, 0.0
  %v340 = vmax.f32 %v335, 0.0
  %v341 = vmax.f32 %v336, 0.0
  %v342 = vmax.f32 %v337, 0.0
  %v343 = vmax.f32 %v338, 0.0
  %v344 = vsub.f32 0.0, %v324
  %v345 = vsub.f32 0.0, %v325
  %v346 = vsub.f32 0.0, %v326
  %v347 = vsub.f32 0.0, %v327
  %v348 = vsub.f32 0.0, %v328
  %v349 = vmax.f32 %v344, 0.0
  %v350 = vmax.f32 %v345, 0.0
  %v351 = vmax.f32 %v346, 0.0
  %v352 = vmax.f32 %v347, 0.0
  %v353 = vmax.f32 %v348, 0.0
  %v354 = vand.u32 2147483647, %v324
  %v355 = vand.u32 2147483647, %v325
  %v356 = vand.u32 2147483647, %v326
  %v357 = vand.u32 2147483647, %v327
  %v358 = vand.u32 2147483647, %v328
  %v359 = vsub.f32 0.0, %v354
  %v360 = vsub.f32 0.0, %v355
  %v361 = vsub.f32 0.0, %v356
  %v362 = vsub.f32 0.0, %v357
  %v363 = vsub.f32 0.0, %v358
  %v364 = vmul.f32 %v359, 1.442695
  %v365 = vpow.pop %v364
  %v366 = vmul.f32 %v360, 1.442695
  %v367 = vpow.pop %v366
  %v368 = vmul.f32 %v361, 1.442695
  %v369 = vpow.pop %v368
  %v370 = vmul.f32 %v362, 1.442695
  %v371 = vpow.pop %v370
  %v372 = vmul.f32 %v363, 1.442695
  %v373 = vpow.pop %v372
  %v374 = vadd.f32 %v365, 1.0
  %v375 = vadd.f32 %v367, 1.0
  %v376 = vadd.f32 %v369, 1.0
  %v377 = vadd.f32 %v371, 1.0
  %v378 = vadd.f32 %v373, 1.0
  %v379 = vlog2.pop %v374
  %v380 = vmul.f32 %v379, 0.6931472
  %v381 = vlog2.pop %v375
  %v382 = vmul.f32 %v381, 0.6931472
  %v383 = vlog2.pop %v376
  %v384 = vmul.f32 %v383, 0.6931472
  %v385 = vlog2.pop %v377
  %v386 = vmul.f32 %v385, 0.6931472
  %v387 = vlog2.pop %v378
  %v388 = vmul.f32 %v387, 0.6931472
  %v389 = vadd.f32 %v349, %v380
  %v390 = vadd.f32 %v350, %v382
  %v391 = vadd.f32 %v351, %v384
  %v392 = vadd.f32 %v352, %v386
  %v393 = vadd.f32 %v353, %v388
  %v394 = vmul.f32 %v339, %v389
  %v395 = vmul.f32 %v340, %v390
  %v396 = vmul.f32 %v341, %v391
  %v397 = vmul.f32 %v342, %v392
  %v398 = vmul.f32 %v343, %v393
  %vm399 = vcmask 1044480
  %v400 = vsel %vm399, %v394, 0.0
  %v401 = vsel %vm399, %v395, 0.0
  %v402 = vadd.f32 %v400, %v401
  %v403 = vsel %vm399, %v396, 0.0
  %v404 = vadd.f32 %v402, %v403
  %v405 = vsel %vm399, %v397, 0.0
  %v406 = vadd.f32 %v404, %v405
  %v407 = vsel %vm399, %v398, 0.0
  %v408 = vadd.f32 %v406, %v407
  %v409 = vsel %vm399, %v408, 0.0
  %v410 = vrot.slane %v409, 4
  %v411 = vadd.f32 %v409, %v410
  %v412 = vrot.slane %v411, 2
  %v413 = vadd.f32 %v411, %v412
  %v414 = vrot.slane %v413, 1
  %v415 = vadd.f32 %v413, %v414
  %416 = vst [vmem:[%s4] sm:$0x1] %v415
  %vm417 = vcmp.gt.f32.partialorder %v254, 0.0
  %vm418 = vcmp.gt.f32.partialorder %v255, 0.0
  %vm419 = vcmp.gt.f32.partialorder %v256, 0.0
  %vm420 = vcmp.gt.f32.partialorder %v257, 0.0
  %vm421 = vcmp.gt.f32.partialorder %v258, 0.0
  %v422 = vsel %vm417, 1, 0
  %v423 = vsel %vm418, 1, 0
  %v424 = vsel %vm419, 1, 0
  %v425 = vsel %vm420, 1, 0
  %v426 = vsel %vm421, 1, 0
  %v427 = vcvt.s32.f32 %v422
  %v428 = vcvt.s32.f32 %v423
  %v429 = vcvt.s32.f32 %v424
  %v430 = vcvt.s32.f32 %v425
  %v431 = vcvt.s32.f32 %v426
  %v432 = vsel %vm399, %v427, 0.0
  %v433 = vsel %vm399, %v428, 0.0
  %v434 = vadd.f32 %v432, %v433
  %v435 = vsel %vm399, %v429, 0.0
  %v436 = vadd.f32 %v434, %v435
  %v437 = vsel %vm399, %v430, 0.0
  %v438 = vadd.f32 %v436, %v437
  %v439 = vsel %vm399, %v431, 0.0
  %v440 = vadd.f32 %v438, %v439
  %v441 = vsel %vm399, %v440, 0.0
  %v442 = vrot.slane %v441, 4
  %v443 = vadd.f32 %v441, %v442
  %v444 = vrot.slane %v443, 2
  %v445 = vadd.f32 %v443, %v444
  %v446 = vrot.slane %v445, 1
  %v447 = vadd.f32 %v445, %v446
  %448 = vst [vmem:[%s5] sm:$0x1] %v447
  // Predicated region
  $region18: #{pairank_loss.1} parent=0 // pred_check
    _
  $region19: #{pairank_loss.1} parent=0 // pred_check_branch
    %450 = sbr.rel (0) target = $region21
  $region20: #{pairank_loss.1} parent=0 // pred_region
    _
  $region21: #{pairank_loss.1} parent=0 // pred_fallthru
    _
  // Predicated region
  $region22: #{pairank_loss.1} parent=0 // pred_check
    _
  $region23: #{pairank_loss.1} parent=0 // pred_check_branch
    %452 = sbr.rel (0) target = $region25
  $region24: #{pairank_loss.1} parent=0 // pred_region
    _
  $region25: #{pairank_loss.1} parent=0 // pred_fallthru
    _
  // Predicated region
  $region26: #{pairank_loss.1} parent=0 // pred_check
    _
  $region27: #{pairank_loss.1} parent=0 // pred_check_branch
    %454 = sbr.rel (0) target = $region29
  $region28: #{pairank_loss.1} parent=0 // pred_region
    _
  $region29: #{pairank_loss.1} parent=0 // pred_fallthru
    _
  // Predicated region
  $region30: #{pairank_loss.1} parent=0 // pred_check
    _
  $region31: #{pairank_loss.1} parent=0 // pred_check_branch
    %456 = sbr.rel (0) target = $region33
  $region32: #{pairank_loss.1} parent=0 // pred_region
    _
  $region33: #{pairank_loss.1} parent=0 // pred_fallthru
    _

</llo_original>
